<compile_context>
chip_gen: v6e
topology: v6e:2x2x1
jax: 0.10.0
libtpu: 0.0.40
codegen_flags: <defaults>
</compile_context>

<pallas_src>
import functools

import jax
import jax.numpy as jnp
from jax.experimental import pallas as pl
from jax.experimental.pallas import tpu as pltpu


def _focal_loss_kernel(logits_ref, targets_ref, out_ref, *,
                       alpha, gamma, ignore_index, hw, t_hw, num_j):
    s = pl.program_id(1)          # position-split axis (v7x two-core split)
    j = pl.program_id(2)          # reduction axis (innermost, "arbitrary")

    # Output block is resident across the whole j sweep for this (n, s):
    # zero it once, accumulate directly (no scratch accumulator needed).
    @pl.when(j == 0)
    def _():
        out_ref[...] = jnp.zeros_like(out_ref)

    logits = logits_ref[0].astype(jnp.float32)          # (C, t_hw) classes on sublanes
    tgt = targets_ref[0].astype(jnp.int32)              # (1, t_hw)

    # Softmax statistics over the class (sublane) axis.
    m = jnp.max(logits, axis=0, keepdims=True)          # (1, t_hw)
    e = jnp.exp(logits - m)                              # (C, t_hw)
    sum_e = jnp.sum(e, axis=0, keepdims=True)            # (1, t_hw)
    lse = m + jnp.log(sum_e)                             # (1, t_hw)

    # Gather target-class logit AND target-class exp via one-hot selects
    # over sublanes (VPU + cross-sublane reduce; deliberately no MXU).
    class_ids = jax.lax.broadcasted_iota(jnp.int32, logits.shape, 0)
    onehot = class_ids == tgt
    t_logit = jnp.sum(jnp.where(onehot, logits, 0.0), axis=0, keepdims=True)
    t_exp = jnp.sum(jnp.where(onehot, e, 0.0), axis=0, keepdims=True)

    # Validity: not ignore_index AND inside the real spatial extent (handles
    # the ragged last tile and any clamped fully-out-of-range tile).
    blk = s * num_j + j
    pos = blk * t_hw + jax.lax.broadcasted_iota(jnp.int32, tgt.shape, 1)
    valid = jnp.logical_and(tgt != ignore_index, pos < hw)

    ce = lse - t_logit                                    # cross-entropy
    pt = t_exp / sum_e                                    # == exp(-ce), reuses `e`
    base = jnp.maximum(1.0 - pt, 0.0)                     # guard fp roundoff

    g = float(gamma)
    if g.is_integer():
        base_pow = base ** int(g)                         # gamma=2: one VPU mul
    else:
        base_pow = jnp.power(base, g)

    # SELECT (not multiply) so NaN/Inf from out-of-range lanes cannot leak.
    focal = jnp.where(valid, alpha * base_pow * ce, 0.0)  # (1, t_hw)
    out_ref[...] += focal.reshape(out_ref.shape)


def focal_loss(inputs, targets, *, alpha=0.25, gamma=2.0, size_average=True,
               ignore_index=255, max_tile_hw=128 * 1024,
               vmem_budget_bytes=None):
    """Focal loss matching the PyTorch module's forward.

    inputs:  float logits, shape (N, C, H, W)
    targets: int class indices, shape (N, H, W) (value 255 = ignored)
    returns: scalar float32
    """
    N, C, H, W = inputs.shape
    HW = H * W

    # Metadata-only reshapes; targets stay in their native dtype (no extra
    # HBM array, narrower input traffic if they arrive as uint8/int16).
    logits = inputs.reshape(N, C, HW)
    tgt = targets.reshape(N, 1, HW)

    # ---- per-generation VMEM budget & position-tile sizing ----------------
    if vmem_budget_bytes is None:
        try:
            phys = int(pltpu.get_tpu_info().vmem_capacity_bytes)
        except Exception:
            phys = 64 * 1024 * 1024                      # v7x-safe fallback
        # ~3/4 of physical: 48 MiB on v7x (64 MiB), 96 MiB on v5e/v6e (128 MiB)
        vmem_budget_bytes = min(phys * 3 // 4, 96 * 1024 * 1024)

    in_itemsize = inputs.dtype.itemsize
    tgt_itemsize = targets.dtype.itemsize
    # double-buffered logits + targets, f32 output block (x2), plus ~4 C-wide
    # f32 in-kernel temporaries (exp array, one-hot selects, class iota).
    bytes_per_pos = 2 * C * in_itemsize + 2 * tgt_itemsize + 2 * 4 + 4 * C * 4

    hw_pad = ((HW + 127) // 128) * 128
    t_hw = vmem_budget_bytes // bytes_per_pos
    t_hw = min(int(t_hw), int(max_tile_hw), hw_pad)
    t_hw = max(128, (t_hw // 128) * 128)

    num_blocks = pl.cdiv(HW, t_hw)
    # Guarantee >=2-way extent on the parallel axes for v7x's two TensorCores
    # even when N == 1, by splitting the position tiles into S halves.
    S = 2 if (N == 1 and num_blocks >= 2) else 1
    num_j = pl.cdiv(num_blocks, S)
    last_blk = num_blocks - 1

    kernel = functools.partial(
        _focal_loss_kernel,
        alpha=float(alpha), gamma=float(gamma), ignore_index=int(ignore_index),
        hw=int(HW), t_hw=int(t_hw), num_j=int(num_j))

    def _in_block(n, s, j):
        # Clamp so the DMA never targets a block fully past the array end
        # (possible when S * num_j > num_blocks); the in-kernel position mask
        # zeroes any such duplicated tile.
        return (n, 0, jnp.minimum(s * num_j + j, last_blk))

    partials = pl.pallas_call(
        kernel,
        out_shape=jax.ShapeDtypeStruct((N * S, 1, t_hw), jnp.float32),
        grid_spec=pltpu.PrefetchScalarGridSpec(
            num_scalar_prefetch=0,
            grid=(N, S, num_j),
            in_specs=[
                pl.BlockSpec((1, C, t_hw), _in_block),
                pl.BlockSpec((1, 1, t_hw), _in_block),
            ],
            out_specs=pl.BlockSpec((1, 1, t_hw),
                                   lambda n, s, j: (n * S + s, 0, 0)),
        ),
        compiler_params=pltpu.CompilerParams(
            dimension_semantics=("parallel", "parallel", "arbitrary"),
            vmem_limit_bytes=int(vmem_budget_bytes)),
    )(logits, tgt)

    total = jnp.sum(partials)
    # Matches F.cross_entropy(reduction='none', ignore_index) + .mean():
    # ignored pixels contribute 0 but still count in the mean denominator.
    denom = jnp.float32(N * HW) if size_average else jnp.float32(1.0)
    return total / denom


def _focal_loss_ref(inputs, targets, *, alpha=0.25, gamma=2.0,
                    size_average=True, ignore_index=255):
    # Pure-JAX reference of the PyTorch forward, for correctness checking.
    N, C, H, W = inputs.shape
    logits = jnp.transpose(inputs, (0, 2, 3, 1)).reshape(-1, C).astype(jnp.float32)
    tgt = targets.reshape(-1).astype(jnp.int32)
    lse = jax.nn.logsumexp(logits, axis=-1)
    safe_tgt = jnp.where(tgt == ignore_index, 0, tgt)
    t_logit = jnp.take_along_axis(logits, safe_tgt[:, None], axis=-1)[:, 0]
    ce = jnp.where(tgt == ignore_index, 0.0, lse - t_logit)
    pt = jnp.exp(-ce)
    focal = alpha * (1.0 - pt) ** gamma * ce
    return jnp.mean(focal) if size_average else jnp.sum(focal)


if __name__ == "__main__":
    key = jax.random.PRNGKey(0)
    k_x, k_t, k_m = jax.random.split(key, 3)

    # 1) Shape consistent with the module: N=2, C=4 classes, 16x16 spatial.
    N, C, H, W = 2, 4, 16, 16
    x = jax.random.normal(k_x, (N, C, H, W), dtype=jnp.float32)
    t = jax.random.randint(k_t, (N, H, W), 0, C, dtype=jnp.int32)
    ignore_mask = jax.random.bernoulli(k_m, 0.1, (N, H, W))
    t = jnp.where(ignore_mask, 255, t)
    loss = jax.block_until_ready(focal_loss(x, t))
    ref = jax.block_until_ready(_focal_loss_ref(x, t))
    assert jnp.allclose(loss, ref, rtol=1e-4, atol=1e-6), (loss, ref)

    # 2) Ragged spatial extent (HW=400, not a multiple of 128) exercises the
    #    in-kernel position mask; also check size_average=False (sum).
    H2, W2 = 20, 20
    x2 = jax.random.normal(k_x, (N, C, H2, W2), dtype=jnp.float32)
    t2 = jax.random.randint(k_t, (N, H2, W2), 0, C, dtype=jnp.int32)
    loss2 = jax.block_until_ready(focal_loss(x2, t2, size_average=False))
    ref2 = jax.block_until_ready(_focal_loss_ref(x2, t2, size_average=False))
    assert jnp.allclose(loss2, ref2, rtol=1e-4, atol=1e-4), (loss2, ref2)

    # 3) N=1 with a small forced tile: exercises the multi-tile reduction
    #    axis, the ragged last tile, the clamped out-of-range block, and the
    #    2-way position split used to feed both v7x TensorCores.
    H3, W3 = 40, 40
    x3 = jax.random.normal(k_x, (1, C, H3, W3), dtype=jnp.float32)
    t3 = jax.random.randint(k_t, (1, H3, W3), 0, C, dtype=jnp.int32)
    t3 = jnp.where(jax.random.bernoulli(k_m, 0.1, (1, H3, W3)), 255, t3)
    loss3 = jax.block_until_ready(focal_loss(x3, t3, max_tile_hw=256))
    ref3 = jax.block_until_ready(_focal_loss_ref(x3, t3))
    assert jnp.allclose(loss3, ref3, rtol=1e-4, atol=1e-6), (loss3, ref3)

    print("KERNEL_OK")
</pallas_src>

<mosaic_0001>
module attributes {stable_mosaic.version = 11 : i64} {
  func.func @_focal_loss_kernel(%arg0: i32, %arg1: i32, %arg2: i32, %arg3: memref<1x4x256xf32, #tpu.memory_space<vmem>>, %arg4: memref<1x1x256xi32, #tpu.memory_space<vmem>>, %arg5: memref<1x1x256xf32, #tpu.memory_space<vmem>>) attributes {dimension_semantics = [#tpu.dimension_semantics<parallel>, #tpu.dimension_semantics<parallel>, #tpu.dimension_semantics<arbitrary>], iteration_bounds = array<i64: 2, 1, 1>, scalar_prefetch = 0 : i64, scratch_operands = 0 : i64, tpu.core_type = #tpu.core_type<tc>, window_params = [{transform_indices = @transform_0, window_bounds = array<i64: 1, 4, 256>}, {transform_indices = @transform_1, window_bounds = array<i64: 1, 1, 256>}, {transform_indices = @transform_2, window_bounds = array<i64: 1, 1, 256>}]} {
    %c0_i32 = arith.constant 0 : i32
    %0 = arith.cmpi eq, %arg2, %c0_i32 : i32
    %1 = arith.extui %0 : i1 to i32
    %c0_i32_0 = arith.constant 0 : i32
    %2 = arith.cmpi ne, %1, %c0_i32_0 : i32
    scf.if %2 {
      %cst_22 = arith.constant 0.000000e+00 : f32
      %54 = vector.broadcast %cst_22 : f32 to vector<1x1x256xf32>
      %c0_23 = arith.constant 0 : index
      %c0_24 = arith.constant 0 : index
      %c0_25 = arith.constant 0 : index
      %55 = vector.load %arg5[%c0_23, %c0_24, %c0_25] : memref<1x1x256xf32, #tpu.memory_space<vmem>>, vector<1x1x256xf32>
      tpu.vector_store %arg5[%c0_23, %c0_24, %c0_25], %54 {strides = array<i32>} : memref<1x1x256xf32, #tpu.memory_space<vmem>>, vector<1x1x256xf32>,
    } else {
    }
    %c0 = arith.constant 0 : index
    %c0_1 = arith.constant 0 : index
    %c0_2 = arith.constant 0 : index
    %3 = vector.load %arg3[%c0, %c0_1, %c0_2] : memref<1x4x256xf32, #tpu.memory_space<vmem>>, vector<1x4x256xf32>
    %4 = vector.shape_cast %3 : vector<1x4x256xf32> to vector<4x256xf32>
    %c0_3 = arith.constant 0 : index
    %c0_4 = arith.constant 0 : index
    %c0_5 = arith.constant 0 : index
    %5 = vector.load %arg4[%c0_3, %c0_4, %c0_5] : memref<1x1x256xi32, #tpu.memory_space<vmem>>, vector<1x1x256xi32>
    %6 = vector.shape_cast %5 : vector<1x1x256xi32> to vector<1x256xi32>
    %cst = arith.constant dense<0xFF800000> : vector<256xf32>
    %7 = vector.multi_reduction <maximumf>, %4, %cst [0] : vector<4x256xf32> to vector<256xf32>
    %8 = vector.shape_cast %7 : vector<256xf32> to vector<1x256xf32>
    %9 = vector.broadcast %8 : vector<1x256xf32> to vector<4x256xf32>
    %10 = arith.subf %4, %9 : vector<4x256xf32>
    %11 = math.exp %10 : vector<4x256xf32>
    %cst_6 = arith.constant dense<0.000000e+00> : vector<256xf32>
    %12 = vector.multi_reduction <add>, %11, %cst_6 [0] : vector<4x256xf32> to vector<256xf32>
    %13 = vector.shape_cast %12 : vector<256xf32> to vector<1x256xf32>
    %14 = math.log %13 : vector<1x256xf32>
    %15 = arith.addf %8, %14 : vector<1x256xf32>
    %16 = tpu.iota {dimensions = array<i32: 0>} : vector<4x256xi32>
    %17 = vector.broadcast %6 : vector<1x256xi32> to vector<4x256xi32>
    %18 = arith.cmpi eq, %16, %17 : vector<4x256xi32>
    %cst_7 = arith.constant 0.000000e+00 : f32
    %19 = vector.broadcast %cst_7 : f32 to vector<4x256xf32>
    %20 = arith.select %18, %4, %19 : vector<4x256xi1>, vector<4x256xf32>
    %cst_8 = arith.constant dense<0.000000e+00> : vector<256xf32>
    %21 = vector.multi_reduction <add>, %20, %cst_8 [0] : vector<4x256xf32> to vector<256xf32>
    %22 = vector.shape_cast %21 : vector<256xf32> to vector<1x256xf32>
    %cst_9 = arith.constant 0.000000e+00 : f32
    %23 = vector.broadcast %cst_9 : f32 to vector<4x256xf32>
    %24 = arith.select %18, %11, %23 : vector<4x256xi1>, vector<4x256xf32>
    %cst_10 = arith.constant dense<0.000000e+00> : vector<256xf32>
    %25 = vector.multi_reduction <add>, %24, %cst_10 [0] : vector<4x256xf32> to vector<256xf32>
    %26 = vector.shape_cast %25 : vector<256xf32> to vector<1x256xf32>
    %c1_i32 = arith.constant 1 : i32
    %27 = arith.muli %arg1, %c1_i32 : i32
    %28 = arith.addi %27, %arg2 : i32
    %c256_i32 = arith.constant 256 : i32
    %29 = arith.muli %28, %c256_i32 : i32
    %30 = tpu.iota {dimensions = array<i32: 1>} : vector<1x256xi32>
    %31 = vector.broadcast %29 : i32 to vector<1x256xi32>
    %32 = arith.addi %31, %30 : vector<1x256xi32>
    %c255_i32 = arith.constant 255 : i32
    %33 = vector.broadcast %c255_i32 : i32 to vector<1x256xi32>
    %34 = arith.cmpi ne, %6, %33 : vector<1x256xi32>
    %c256_i32_11 = arith.constant 256 : i32
    %35 = vector.broadcast %c256_i32_11 : i32 to vector<1x256xi32>
    %36 = arith.cmpi slt, %32, %35 : vector<1x256xi32>
    %37 = arith.andi %34, %36 : vector<1x256xi1>
    %38 = arith.subf %15, %22 : vector<1x256xf32>
    %39 = arith.divf %26, %13 : vector<1x256xf32>
    %cst_12 = arith.constant 1.000000e+00 : f32
    %40 = vector.broadcast %cst_12 : f32 to vector<1x256xf32>
    %41 = arith.subf %40, %39 : vector<1x256xf32>
    %cst_13 = arith.constant 0.000000e+00 : f32
    %42 = vector.broadcast %cst_13 : f32 to vector<1x256xf32>
    %43 = arith.maximumf %41, %42 : vector<1x256xf32>
    %44 = arith.mulf %43, %43 : vector<1x256xf32>
    %cst_14 = arith.constant 2.500000e-01 : f32
    %45 = vector.broadcast %cst_14 : f32 to vector<1x256xf32>
    %46 = arith.mulf %45, %44 : vector<1x256xf32>
    %47 = arith.mulf %46, %38 : vector<1x256xf32>
    %cst_15 = arith.constant 0.000000e+00 : f32
    %48 = vector.broadcast %cst_15 : f32 to vector<1x256xf32>
    %49 = arith.select %37, %47, %48 : vector<1x256xi1>, vector<1x256xf32>
    %c0_16 = arith.constant 0 : index
    %c0_17 = arith.constant 0 : index
    %c0_18 = arith.constant 0 : index
    %50 = vector.load %arg5[%c0_16, %c0_17, %c0_18] : memref<1x1x256xf32, #tpu.memory_space<vmem>>, vector<1x1x256xf32>
    %51 = vector.shape_cast %49 : vector<1x256xf32> to vector<1x1x256xf32>
    %52 = arith.addf %50, %51 : vector<1x1x256xf32>
    %c0_19 = arith.constant 0 : index
    %c0_20 = arith.constant 0 : index
    %c0_21 = arith.constant 0 : index
    %53 = vector.load %arg5[%c0_19, %c0_20, %c0_21] : memref<1x1x256xf32, #tpu.memory_space<vmem>>, vector<1x1x256xf32>
    tpu.vector_store %arg5[%c0_19, %c0_20, %c0_21], %52 {strides = array<i32>} : memref<1x1x256xf32, #tpu.memory_space<vmem>>, vector<1x1x256xf32>,
    return
  }
  func.func @transform_0(%arg0: i32, %arg1: i32, %arg2: i32) -> (i32, i32, i32) {
    %c1_i32 = arith.constant 1 : i32
    %0 = arith.muli %arg1, %c1_i32 : i32
    %1 = arith.addi %0, %arg2 : i32
    %c0_i32 = arith.constant 0 : i32
    %2 = arith.minsi %1, %c0_i32 : i32
    %c0_i32_0 = arith.constant 0 : i32
    %c0_i32_1 = arith.constant 0 : i32
    return %arg0, %c0_i32_0, %2 : i32, i32, i32
  }
  func.func @transform_1(%arg0: i32, %arg1: i32, %arg2: i32) -> (i32, i32, i32) {
    %c1_i32 = arith.constant 1 : i32
    %0 = arith.muli %arg1, %c1_i32 : i32
    %1 = arith.addi %0, %arg2 : i32
    %c0_i32 = arith.constant 0 : i32
    %2 = arith.minsi %1, %c0_i32 : i32
    %c0_i32_0 = arith.constant 0 : i32
    %c0_i32_1 = arith.constant 0 : i32
    return %arg0, %c0_i32_0, %2 : i32, i32, i32
  }
  func.func @transform_2(%arg0: i32, %arg1: i32, %arg2: i32) -> (i32, i32, i32) {
    %c1_i32 = arith.constant 1 : i32
    %0 = arith.muli %arg0, %c1_i32 : i32
    %1 = arith.addi %0, %arg1 : i32
    %c0_i32 = arith.constant 0 : i32
    %c0_i32_0 = arith.constant 0 : i32
    %c0_i32_1 = arith.constant 0 : i32
    return %1, %c0_i32, %c0_i32_0 : i32, i32, i32
  }
}

</mosaic_0001>

<llo_original>
// kernel: tpu_custom_call.1
$region0: #{tpu_custom_call.1}
  #allocation0 [shape = 'u32[]', space=smem, size = 0x4, offset = 0x4, fixed_abs, tag = 'smem constant byte address 0x4 - core index']
  #allocation1 [shape = 'u32[144,128]{1,0:T(1,128)}', space=vmem, size = 0x12000, scoped, tag = 'internal scratch']
  %s0 = inlined_call_operand.hbm [shape: f32[2,4,256], index: 0, kind: input, shape index: {}]
  %s1 = inlined_call_operand.hbm [shape: s32[2,1,256], index: 1, kind: input, shape index: {}]
  %s2 = inlined_call_operand.hbm [shape: f32[2,1,256], index: 2, kind: output, shape index: {}]
  %s3 = sld [smem:[#allocation0]]
  $region53: #{tpu_custom_call.1} parent=0
    _
  %s5 = ssub.s32 1, %s3
  %s6 = scalar_select 0, %s5, %s3
  $region1: #{tpu_custom_call.1} parent=0
    #allocation2 [shape = 'u8[8192]{0}', space=vmem, size = 0x2000, scoped, tag = 'input window, operand 0']
    #allocation3 [shape = 's32[2]{0}', space=sflag, size = 0x8, scoped, tag = 'scoped memory for tpu_custom_call.1']
    #allocation4 [shape = 's32[2]{0}', space=sflag, size = 0x8, scoped, tag = 'scoped memory for tpu_custom_call.1']
    #allocation5 [shape = 'u8[2048]{0}', space=vmem, size = 0x800, scoped, tag = 'input window, operand 1']
    #allocation6 [shape = 's32[2]{0}', space=sflag, size = 0x8, scoped, tag = 'scoped memory for tpu_custom_call.1']
    #allocation7 [shape = 'u8[2048]{0}', space=vmem, size = 0x800, scoped, tag = 'output window, operand 0']
    %7 = vsyncpa [#allocation3], 0
    %s8 = scalar_lea.sflag [#allocation3], 1
    %9 = vsyncpa %s8, 0
    %10 = vsyncpa [#allocation6], 0
    %s11 = scalar_lea.sflag [#allocation6], 1
    %12 = vsyncpa %s11, 0
    %13 = vsyncpa [#allocation4], 0
    %s14 = scalar_lea.sflag [#allocation4], 1
    %15 = vsyncpa %s14, 0
    loop: start=0, step=1, limit=4
    $region2: #{tpu_custom_call.1} parent=1 // loop_pre_header
      _
    $region3: #{tpu_custom_call.1} parent=1 // loop_header
      %s17 = sphi 0, %s21
      %p18 = scmp.ge.s32.totalorder %s17, 4
      %s24 = sphi 0, %s43
      %s25 = sphi 0, %s39
      %s26 = sphi 0, %s35
      %s27 = sphi 0, %s24
      %s28 = sphi 0, %s25
      %s29 = sphi 0, %s26
      %s30 = sphi 0, %s27
      %s31 = sphi 0, %s28
      %s32 = sphi 0, %s29
      %s54 = sphi 0, %s56
      %s57 = sphi 0, %s54
      %s58 = sphi 0, %s57
      %s74 = sphi 0, %s58
      %s88 = sphi 0, %s90
      %s91 = sphi 0, %s88
      %s92 = sphi 0, %s91
      %s108 = sphi 0, %s92
      %s116 = sphi 0, %s118
      %s119 = sphi 0, %s116
      %s120 = sphi 0, %s119
      %s136 = sphi 0, %s120
    $region4: #{tpu_custom_call.1} parent=1 // loop_header_branch
      %20 = sbr.rel (%p18) target = $region8
    $region5: #{tpu_custom_call.1} parent=1 // loop_body
      %s22 = ssub.s32 %s17, 1
      %s23 = ssub.s32 %s17, 2
      %s33 = sadd.s32 1, %s26
      %p34 = scmp.ge.s32.totalorder %s33, 1
      %s35 = scalar_select %p34, 0, %s33
      %s36 = sadd.s32 1, %s25
      %s37 = scalar_select %p34, %s36, %s25
      %p38 = scmp.ge.s32.totalorder %s37, 1
      %s39 = scalar_select %p38, 0, %s37
      %s40 = sadd.s32 1, %s24
      %s41 = scalar_select %p38, %s40, %s24
      %p42 = scmp.ge.s32.totalorder %s41, 2
      %s43 = scalar_select %p42, 0, %s41
      %s44 = sadd.s32 %s25, %s26
      %p45 = scmp.lt.s32.totalorder %s44, 0
      %s46 = scalar_select %p45, %s44, 0
      %s47 = sadd.s32 %s39, %s35
      %p48 = scmp.lt.s32.totalorder %s47, 0
      %s49 = scalar_select %p48, %s47, 0
      %s50 = ssub.s32 %s24, %s43
      %s51 = ssub.s32 %s46, %s49
      %s52 = sor.u32 %s50, %s51
      %p53 = scmp.eq.s32.totalorder %s52, 0
      %s55 = sadd.s32 %s54, 1
      %s56 = scalar_select %p53, %s54, %s55
      %p59 = pneg %p53
      %p60 = scmp.eq.s32.totalorder %s17, 1
      %p61 = por %p59, %p60
      %p62 = scmp.ne.s32.totalorder %s54, %s57
      %p63 = scmp.eq.s32.totalorder %s17, 0
      %p64 = por %p62, %p63
      %p65 = scmp.ne.s32.totalorder %s54, %s57
      %p66 = scmp.eq.s32.totalorder %s22, 1
      %p67 = por %p65, %p66
      %p68 = scmp.ne.s32.totalorder %s57, %s58
      %p69 = scmp.eq.s32.totalorder %s22, 0
      %p70 = por %p68, %p69
      %p71 = scmp.ne.s32.totalorder %s57, %s58
      %p72 = scmp.eq.s32.totalorder %s23, 1
      %p73 = por %p71, %p72
      %p75 = scmp.ne.s32.totalorder %s58, %s74
      %p76 = scmp.eq.s32.totalorder %s23, 0
      %p77 = por %p75, %p76
      %s78 = sadd.s32 %s25, %s26
      %p79 = scmp.lt.s32.totalorder %s78, 0
      %s80 = scalar_select %p79, %s78, 0
      %s81 = sadd.s32 %s39, %s35
      %p82 = scmp.lt.s32.totalorder %s81, 0
      %s83 = scalar_select %p82, %s81, 0
      %s84 = ssub.s32 %s24, %s43
      %s85 = ssub.s32 %s80, %s83
      %s86 = sor.u32 %s84, %s85
      %p87 = scmp.eq.s32.totalorder %s86, 0
      %s89 = sadd.s32 %s88, 1
      %s90 = scalar_select %p87, %s88, %s89
      %p93 = pneg %p87
      %p94 = scmp.eq.s32.totalorder %s17, 1
      %p95 = por %p93, %p94
      %p96 = scmp.ne.s32.totalorder %s88, %s91
      %p97 = scmp.eq.s32.totalorder %s17, 0
      %p98 = por %p96, %p97
      %p99 = scmp.ne.s32.totalorder %s88, %s91
      %p100 = scmp.eq.s32.totalorder %s22, 1
      %p101 = por %p99, %p100
      %p102 = scmp.ne.s32.totalorder %s91, %s92
      %p103 = scmp.eq.s32.totalorder %s22, 0
      %p104 = por %p102, %p103
      %p105 = scmp.ne.s32.totalorder %s91, %s92
      %p106 = scmp.eq.s32.totalorder %s23, 1
      %p107 = por %p105, %p106
      %p109 = scmp.ne.s32.totalorder %s92, %s108
      %p110 = scmp.eq.s32.totalorder %s23, 0
      %p111 = por %p109, %p110
      %s112 = sadd.s32 %s24, %s25
      %s113 = sadd.s32 %s43, %s39
      %s114 = ssub.s32 %s112, %s113
      %p115 = scmp.eq.s32.totalorder %s114, 0
      %s117 = sadd.s32 %s116, 1
      %s118 = scalar_select %p115, %s116, %s117
      %p121 = pneg %p115
      %p122 = scmp.eq.s32.totalorder %s17, 1
      %p123 = por %p121, %p122
      %p124 = scmp.ne.s32.totalorder %s116, %s119
      %p125 = scmp.eq.s32.totalorder %s17, 0
      %p126 = por %p124, %p125
      %p127 = scmp.ne.s32.totalorder %s116, %s119
      %p128 = scmp.eq.s32.totalorder %s22, 1
      %p129 = por %p127, %p128
      %p130 = scmp.ne.s32.totalorder %s119, %s120
      %p131 = scmp.eq.s32.totalorder %s22, 0
      %p132 = por %p130, %p131
      %p133 = scmp.ne.s32.totalorder %s119, %s120
      %p134 = scmp.eq.s32.totalorder %s23, 1
      %p135 = por %p133, %p134
      %p137 = scmp.ne.s32.totalorder %s120, %s136
      %p138 = scmp.eq.s32.totalorder %s23, 0
      %p139 = por %p137, %p138
      %p140 = scmp.le.s32.totalorder 1, %s17
      %p141 = scmp.lt.s32.totalorder %s17, 3
      %p142 = pnand %p140, %p141
      %p143 = pneg %p142
      // Predicated region
      $region9: #{tpu_custom_call.1} parent=5 // pred_check
        _
      $region10: #{tpu_custom_call.1} parent=5 // pred_check_branch
        %145 = sbr.rel (%p142) target = $region12
      $region11: #{tpu_custom_call.1} parent=5 // pred_region
        %s146 = ssub.s32 %s17, 1
      $region12: #{tpu_custom_call.1} parent=5 // pred_fallthru
        _
      %p147 = scmp.lt.s32.totalorder %s17, 2
      // Predicated region
      $region13: #{tpu_custom_call.1} parent=5 // pred_check
        %p148 = pneg %p147
      $region14: #{tpu_custom_call.1} parent=5 // pred_check_branch
        %150 = sbr.rel (%p148) target = $region16
      $region15: #{tpu_custom_call.1} parent=5 // pred_region
        // Predicated region
        $region17: #{tpu_custom_call.1} parent=15 // pred_check
          %p151 = pneg %p64
        $region18: #{tpu_custom_call.1} parent=15 // pred_check_branch
          %153 = sbr.rel (%p151) target = $region20
        $region19: #{tpu_custom_call.1} parent=15 // pred_region
          %s154 = sand.u32 %s54, 1
          %s155 = scalar_lea.sflag [#allocation3], %s154
          %s156 = sand.u32 %s54, 1
          %s157 = smul.addr %s156, 8
          %s158 = scalar_lea.vmem [#allocation2], %s157
          %s159 = sadd.s32 %s25, %s26
          %p160 = scmp.lt.s32.totalorder %s159, 0
          %s161 = scalar_select %p160, %s159, 0
          %s162 = smul.u32 2, %s161
          %s164 = ssub.s32 128, 128
          %165 = vsyncadd %s155, %s164
          %s166 = smul.addr %s24, 2
          %s167 = sadd.s32 %s162, %s166
          %s168 = smul.addr %s167, 64
          %s169 = scalar_lea.hbm %s0, %s168
          %s171 = sshll.u32 %s158, 4
          %s172 = int_to_ptr.vmem [resolvable:$true] %s171
          %174 = dma.hbm_to_vmem [thread:$0]  %s169, 128, %s172, %s155
        $region20: #{tpu_custom_call.1} parent=15 // pred_fallthru
          _
        // Predicated region
        $region21: #{tpu_custom_call.1} parent=15 // pred_check
          %p175 = pneg %p98
        $region22: #{tpu_custom_call.1} parent=15 // pred_check_branch
          %177 = sbr.rel (%p175) target = $region24
        $region23: #{tpu_custom_call.1} parent=15 // pred_region
          %s178 = sand.u32 %s88, 1
          %s179 = scalar_lea.sflag [#allocation6], %s178
          %s180 = sand.u32 %s88, 1
          %s181 = smul.addr %s180, 2
          %s182 = scalar_lea.vmem [#allocation5], %s181
          %s183 = sadd.s32 %s25, %s26
          %p184 = scmp.lt.s32.totalorder %s183, 0
          %s185 = scalar_select %p184, %s183, 0
          %s186 = smul.u32 2, %s185
          %s188 = ssub.s32 32, 32
          %189 = vsyncadd %s179, %s188
          %s190 = smul.addr %s24, 2
          %s191 = sadd.s32 %s186, %s190
          %s192 = smul.addr %s191, 16
          %s193 = scalar_lea.hbm %s1, %s192
          %s195 = sshll.u32 %s182, 4
          %s196 = int_to_ptr.vmem [resolvable:$true] %s195
          %198 = dma.hbm_to_vmem [thread:$0]  %s193, 32, %s196, %s179
        $region24: #{tpu_custom_call.1} parent=15 // pred_fallthru
          _
      $region16: #{tpu_custom_call.1} parent=5 // pred_fallthru
        _
      %p199 = scmp.le.s32.totalorder 1, %s17
      %p200 = scmp.lt.s32.totalorder %s17, 3
      %p201 = pnand %p199, %p200
      %p202 = pneg %p201
      // Predicated region
      $region25: #{tpu_custom_call.1} parent=5 // pred_check
        _
      $region26: #{tpu_custom_call.1} parent=5 // pred_check_branch
        %204 = sbr.rel (%p201) target = $region28
      $region27: #{tpu_custom_call.1} parent=5 // pred_region
        %s205 = ssub.s32 %s17, 1
        %s206 = sand.u32 %s57, 1
        %s207 = scalar_lea.sflag [#allocation3], %s206
        %s208 = sand.u32 %s57, 1
        %s209 = smul.addr %s208, 8
        %s210 = scalar_lea.vmem [#allocation2], %s209
        // Predicated region
        $region29: #{tpu_custom_call.1} parent=27 // pred_check
          %p211 = pneg %p70
        $region30: #{tpu_custom_call.1} parent=27 // pred_check_branch
          %213 = sbr.rel (%p211) target = $region32
        $region31: #{tpu_custom_call.1} parent=27 // pred_region
          %214 = dma.done %s207, 128
        $region32: #{tpu_custom_call.1} parent=27 // pred_fallthru
          _
        %s215 = sand.u32 %s91, 1
        %s216 = scalar_lea.sflag [#allocation6], %s215
        %s217 = sand.u32 %s91, 1
        %s218 = smul.addr %s217, 2
        %s219 = scalar_lea.vmem [#allocation5], %s218
        // Predicated region
        $region33: #{tpu_custom_call.1} parent=27 // pred_check
          %p220 = pneg %p104
        $region34: #{tpu_custom_call.1} parent=27 // pred_check_branch
          %222 = sbr.rel (%p220) target = $region36
        $region35: #{tpu_custom_call.1} parent=27 // pred_region
          %223 = dma.done %s216, 32
        $region36: #{tpu_custom_call.1} parent=27 // pred_fallthru
          _
        %s224 = sand.u32 %s57, 1
        %s225 = scalar_lea.sflag [#allocation3], %s224
        %s226 = sand.u32 %s57, 1
        %s227 = smul.addr %s226, 8
        %s228 = scalar_lea.vmem [#allocation2], %s227
        %p229 = pneg %p70
        %p230 = pneg %p67
        %s231 = sand.u32 %s91, 1
        %s232 = scalar_lea.sflag [#allocation6], %s231
        %s233 = sand.u32 %s91, 1
        %s234 = smul.addr %s233, 2
        %s235 = scalar_lea.vmem [#allocation5], %s234
        %p236 = pneg %p104
        %p237 = pneg %p101
        %p238 = pneg %p132
        %p239 = pneg %p129
        %s240 = sand.u32 %s119, 1
        %s241 = scalar_lea.sflag [#allocation4], %s240
        %s242 = sand.u32 %s119, 1
        %s243 = smul.addr %s242, 2
        %s244 = scalar_lea.vmem [#allocation7], %s243
        %s245 = sadd.s32 %s28, %s29
        %p246 = scmp.lt.s32.totalorder %s245, 0
        %s247 = scalar_select %p246, %s245, 0
        %s248 = smul.u32 2, %s247
        %s249 = sadd.s32 %s28, %s29
        %p250 = scmp.lt.s32.totalorder %s249, 0
        %s251 = scalar_select %p250, %s249, 0
        %s252 = smul.u32 2, %s251
        %s253 = sadd.s32 %s27, %s28
        %p254 = scmp.eq.s32.totalorder %s29, 0
        // Predicated region
        $region37: #{tpu_custom_call.1} parent=27 // pred_check
          %p255 = pneg %p254
        $region38: #{tpu_custom_call.1} parent=27 // pred_check_branch
          %257 = sbr.rel (%p255) target = $region40
        $region39: #{tpu_custom_call.1} parent=27 // pred_region
          %v258 = vlaneseq
          %vm259 = vcmp.ge.s32.totalorder %v258, 0
          %vm260 = vcmp.lt.s32.totalorder %v258, 256
          %vm261 = vmand %vm259, %vm260
          %262 = vst.msk [vmem:[%s244] sm:$0x3] %vm261, 0.0
        $region40: #{tpu_custom_call.1} parent=27 // pred_fallthru
          _
        %v263 = vld [vmem:[%s210] sm:$0xff]
        %v264 = vld [vmem:[%s219] sm:$0x3]
        %v266 = vcombine.high %v263, %v263
        %vm268 = vcmask 1043456
        %v269 = vsel %vm268, %v263, -inf
        %v270 = vrot.slane %v269, 4
        %v271 = vmax.f32 %v269, %v270
        %v272 = vrot.slane %v271, 2
        %v273 = vmax.f32 %v271, %v272
        %v274 = vrot.slane %v273, 1
        %v275 = vmax.f32 %v273, %v274
        %v276 = vsel %vm268, %v266, -inf
        %v277 = vrot.slane %v276, 4
        %v278 = vmax.f32 %v276, %v277
        %v279 = vrot.slane %v278, 2
        %v280 = vmax.f32 %v278, %v279
        %v281 = vrot.slane %v280, 1
        %v282 = vmax.f32 %v280, %v281
        %v285 = vcombine.low %v275, %v282
        %v287 = vsub.f32 %v263, %v285
        %v288 = vmul.f32 %v287, 1.442695
        %v289 = vpow.pop %v288
        %v291 = vcombine.high %v289, %v289
        %v293 = vsel %vm268, %v289, 0.0
        %v294 = vrot.slane %v293, 4
        %v295 = vadd.f32 %v293, %v294
        %v296 = vrot.slane %v295, 2
        %v297 = vadd.f32 %v295, %v296
        %v298 = vrot.slane %v297, 1
        %v299 = vadd.f32 %v297, %v298
        %v300 = vsel %vm268, %v291, 0.0
        %v301 = vrot.slane %v300, 4
        %v302 = vadd.f32 %v300, %v301
        %v303 = vrot.slane %v302, 2
        %v304 = vadd.f32 %v302, %v303
        %v305 = vrot.slane %v304, 1
        %v306 = vadd.f32 %v304, %v305
        %v307 = vlog2.pop %v299
        %v308 = vmul.f32 %v307, 0.6931472
        %v309 = vlog2.pop %v306
        %v310 = vmul.f32 %v309, 0.6931472
        %v311 = vadd.f32 %v275, %v308
        %v312 = vadd.f32 %v282, %v310
        %v313 = vlaneseq
        %v314 = vshrl.u32 %v313, 7
        %v315 = vlaneseq
        %v316 = vshrl.u32 %v315, 7
        %v317 = vsub.s32 0, %v316
        %v318 = vrot.slane %v264, %v317
        %v319 = vlaneseq
        %v320 = vshrl.u32 %v319, 7
        %v321 = vsub.s32 1, %v320
        %v322 = vrot.slane %v264, %v321
        %vm323 = vcmp.eq.s32.totalorder %v314, %v318
        %vm324 = vcmp.eq.s32.totalorder %v314, %v322
        %v325 = vsel %vm323, %v263, 0.0
        %v326 = vsel %vm324, %v266, 0.0
        %v327 = vsel %vm268, %v325, 0.0
        %v328 = vrot.slane %v327, 4
        %v329 = vadd.f32 %v327, %v328
        %v330 = vrot.slane %v329, 2
        %v331 = vadd.f32 %v329, %v330
        %v332 = vrot.slane %v331, 1
        %v333 = vadd.f32 %v331, %v332
        %v334 = vsel %vm268, %v326, 0.0
        %v335 = vrot.slane %v334, 4
        %v336 = vadd.f32 %v334, %v335
        %v337 = vrot.slane %v336, 2
        %v338 = vadd.f32 %v336, %v337
        %v339 = vrot.slane %v338, 1
        %v340 = vadd.f32 %v338, %v339
        %v341 = vsel %vm323, %v289, 0.0
        %v342 = vsel %vm324, %v291, 0.0
        %v343 = vsel %vm268, %v341, 0.0
        %v344 = vrot.slane %v343, 4
        %v345 = vadd.f32 %v343, %v344
        %v346 = vrot.slane %v345, 2
        %v347 = vadd.f32 %v345, %v346
        %v348 = vrot.slane %v347, 1
        %v349 = vadd.f32 %v347, %v348
        %v350 = vsel %vm268, %v342, 0.0
        %v351 = vrot.slane %v350, 4
        %v352 = vadd.f32 %v350, %v351
        %v353 = vrot.slane %v352, 2
        %v354 = vadd.f32 %v352, %v353
        %v355 = vrot.slane %v354, 1
        %v356 = vadd.f32 %v354, %v355
        %s357 = sadd.s32 %s28, %s29
        %s358 = smul.u32 %s357, 256
        %v359 = vlaneseq
        %v360 = vand.u32 %v359, 127
        %v361 = vadd.s32 %v360, 128
        %v362 = vstv %s358
        %v363 = vadd.s32 %v362, %v360
        %v364 = vadd.s32 %v362, %v361
        %vm365 = vcmp.ne.s32.totalorder %v264, 255
        %vm366 = vcmp.lt.s32.totalorder %v363, 256
        %vm367 = vcmp.lt.s32.totalorder %v364, 256
        %v368 = vsel %vm366, 1, 0
        %v369 = vsel %vm367, 1, 0
        %v370 = vcombine.low %v368, %v369
        %v372 = vunpack.c.l.s4 1966171168
        %v373 = vunpack.c.0.s8 %v372
        %v374 = vlaneseq
        %v375 = vshrl.u32 %v374, 7
        %v376 = vsub.s32 %v373, %v375
        %v377 = vrot.slane %v370, %v376
        %v379 = vunpack.c.l.s4 1966171168
        %v380 = vunpack.c.0.s8 %v379
        %v381 = vlaneseq
        %v382 = vshrl.u32 %v381, 7
        %v383 = vsub.s32 %v380, %v382
        %v384 = vrot.slane %v377, %v383
        %vm385 = vcmp.ne.s32.totalorder %v384, 0
        %vm386 = vmand %vm365, %vm385
        %v387 = vsub.f32 %v311, %v333
        %v388 = vsub.f32 %v312, %v340
        %v389 = vrcp.pop %v299
        %v390 = vmul.f32 %v349, %v389
        %v391 = vrcp.pop %v306
        %v392 = vmul.f32 %v356, %v391
        %v393 = vsub.f32 1.0, %v390
        %v394 = vsub.f32 1.0, %v392
        %v395 = vmax.f32 %v393, 0.0
        %v396 = vmax.f32 %v394, 0.0
        %v397 = vmul.f32 %v395, %v395
        %v398 = vmul.f32 %v396, %v396
        %v399 = vmul.f32 %v397, 0.25
        %v400 = vmul.f32 %v398, 0.25
        %v401 = vmul.f32 %v399, %v387
        %v402 = vmul.f32 %v400, %v388
        %v405 = vcombine.low %v401, %v402
        %v407 = vunpack.c.l.s4 1966171168
        %v408 = vunpack.c.0.s8 %v407
        %v409 = vlaneseq
        %v410 = vshrl.u32 %v409, 7
        %v411 = vsub.s32 %v408, %v410
        %v412 = vrot.slane %v405, %v411
        %v414 = vunpack.c.l.s4 1966171168
        %v415 = vunpack.c.0.s8 %v414
        %v416 = vlaneseq
        %v417 = vshrl.u32 %v416, 7
        %v418 = vsub.s32 %v415, %v417
        %v419 = vrot.slane %v412, %v418
        %v421 = vsel %vm386, %v419, 0.0
        %v422 = vld [vmem:[%s244] sm:$0x3]
        %v423 = vadd.f32 %v422, %v421
        %v424 = vlaneseq
        %vm425 = vcmp.ge.s32.totalorder %v424, 0
        %vm426 = vcmp.lt.s32.totalorder %v424, 256
        %vm427 = vmand %vm425, %vm426
        %428 = vst.msk [vmem:[%s244] sm:$0x3] %vm427, %v423
        %s429 = sand.u32 %s119, 1
        %s430 = scalar_lea.sflag [#allocation4], %s429
        %s431 = sand.u32 %s119, 1
        %s432 = smul.addr %s431, 2
        %s433 = scalar_lea.vmem [#allocation7], %s432
        // Predicated region
        $region41: #{tpu_custom_call.1} parent=27 // pred_check
          %p434 = pneg %p129
        $region42: #{tpu_custom_call.1} parent=27 // pred_check_branch
          %436 = sbr.rel (%p434) target = $region44
        $region43: #{tpu_custom_call.1} parent=27 // pred_region
          %s437 = sadd.s32 %s27, %s28
          %s439 = ssub.s32 32, 32
          %440 = vsyncadd %s430, %s439
          %s441 = smul.addr %s437, 2
          %s442 = smul.addr %s441, 16
          %s443 = scalar_lea.hbm %s2, %s442
          %s445 = sshll.u32 %s433, 4
          %s446 = int_to_ptr.vmem [resolvable:$true] %s445
          %448 = dma.vmem_to_hbm [thread:$0]  %s446, 32, %s443, %s430
        $region44: #{tpu_custom_call.1} parent=27 // pred_fallthru
          _
      $region28: #{tpu_custom_call.1} parent=5 // pred_fallthru
        _
      %p449 = scmp.le.s32.totalorder 2, %s17
      // Predicated region
      $region45: #{tpu_custom_call.1} parent=5 // pred_check
        %p450 = pneg %p449
      $region46: #{tpu_custom_call.1} parent=5 // pred_check_branch
        %452 = sbr.rel (%p450) target = $region48
      $region47: #{tpu_custom_call.1} parent=5 // pred_region
        %s453 = ssub.s32 %s17, 2
        // Predicated region
        $region49: #{tpu_custom_call.1} parent=47 // pred_check
          %p454 = pneg %p135
        $region50: #{tpu_custom_call.1} parent=47 // pred_check_branch
          %456 = sbr.rel (%p454) target = $region52
        $region51: #{tpu_custom_call.1} parent=47 // pred_region
          %s457 = sand.u32 %s120, 1
          %s458 = scalar_lea.sflag [#allocation4], %s457
          %s459 = sand.u32 %s120, 1
          %s460 = smul.addr %s459, 2
          %s461 = scalar_lea.vmem [#allocation7], %s460
          %462 = dma.done %s458, 32
        $region52: #{tpu_custom_call.1} parent=47 // pred_fallthru
          _
      $region48: #{tpu_custom_call.1} parent=5 // pred_fallthru
        _
    $region6: #{tpu_custom_call.1} parent=1 // loop_footer
      %s21 = sadd.s32 1, %s17
    $region7: #{tpu_custom_call.1} parent=1 // loop_footer_branch
      %16 = sbr.rel target = $region3
    $region8: #{tpu_custom_call.1} parent=1 // loop_exit
      _
    %463 = vsyncpa [#allocation3], 1
    %s464 = scalar_lea.sflag [#allocation3], 1
    %465 = vsyncpa %s464, 1
    %466 = vsyncpa [#allocation6], 1
    %s467 = scalar_lea.sflag [#allocation6], 1
    %468 = vsyncpa %s467, 1
    %469 = vsyncpa [#allocation4], 1
    %s470 = scalar_lea.sflag [#allocation4], 1
    %471 = vsyncpa %s470, 1

</llo_original>
